<compile_context>
chip_gen: v6e
topology: v6e:2x2x1
jax: 0.10.0
libtpu: 0.0.40
codegen_flags: <defaults>
</compile_context>

<pallas_src>
import functools

import numpy as np
import jax
import jax.numpy as jnp
from jax import lax
from jax.experimental import pallas as pl
from jax.experimental.pallas import tpu as pltpu


_LANE = 128
_SUBLANE = 8
_TARGET_IN_BLOCK_BYTES = 2 * 1024 * 1024  # per-input block (Pallas double-buffers)


def _round_down(x, m):
    return (x // m) * m


def _lat_rmse_kernel(pred_ref, tgt_ref, w_ref, out_ref, acc_ref, *,
                     g, ncols, tile_n, needs_mask):
    """One (row_block, n_block) grid step.

    pred_ref/tgt_ref: (b_tile, tile_n) native dtype (upcast to f32 in-kernel)
    w_ref:            (g, tile_n) f32 pre-scaled weights (cos / mean(cos) / N)
    out_ref:          (b_tile, 1) f32 per-sub-row weighted-SE sums
    acc_ref:          (b_tile, 1) f32 accumulator, resident across the N axis
    """
    n = pl.program_id(1)

    @pl.when(n == 0)
    def _():
        acc_ref[...] = jnp.zeros_like(acc_ref)

    x = pred_ref[...].astype(jnp.float32)
    y = tgt_ref[...].astype(jnp.float32)
    d = x - y
    se = d * d

    b_tile = se.shape[0]
    reps = b_tile // g
    w = w_ref[...]
    if g > 1 and reps > 1:
        # Broadcast the (g, tile_n) weights over the reps batch groups.
        wse = (se.reshape(reps, g, tile_n) * w).reshape(b_tile, tile_n)
    else:
        wse = se * w  # b_tile == g, or g == 1 (plain sublane broadcast)

    if needs_mask:
        # Ragged tail of the flattened spatial axis: mask explicitly (do NOT
        # rely on zero weights — garbage lanes could be NaN/Inf).
        col = lax.broadcasted_iota(jnp.int32, (b_tile, tile_n), 1) + n * tile_n
        wse = jnp.where(col < ncols, wse, 0.0)

    acc_ref[...] += jnp.sum(wse, axis=1, keepdims=True)

    @pl.when(n == pl.num_programs(1) - 1)
    def _():
        out_ref[...] = acc_ref[...]


def _latitude_weighted_rmse_impl(predictions, targets, latitude_grid):
    predictions = jnp.asarray(predictions)
    targets = jnp.asarray(targets)
    assert predictions.shape == targets.shape
    B = predictions.shape[0]
    spatial = predictions.shape[1:]
    N = int(np.prod(spatial))

    # --- weights (tiny, f32): cos(lat deg) / mean(cos), with the 1/(H*W)
    #     spatial-mean factor folded in so the kernel is just a weighted sum.
    w = jnp.cos(jnp.asarray(latitude_grid, dtype=jnp.float32) * (np.pi / 180.0))
    w = w / jnp.mean(w)
    w = (w / float(N)).reshape(-1)  # (N,)

    # --- sub-row split: view (B, N) as (B*G, N/G) so small batches still fill
    #     all 8 sublanes and give >=2 parallel row blocks (contiguous reshape).
    G = 8 if N % 8 == 0 else 1
    ncols = N // G
    rows = B * G
    pred2 = predictions.reshape(rows, ncols)
    tgt2 = targets.reshape(rows, ncols)
    w2 = w.reshape(G, ncols)

    itemsize = predictions.dtype.itemsize

    # --- row tiling (parallel axis): sublane-aligned, capped by VMEM budget,
    #     prefer >=2 blocks so the batch axis shards across v7x's two TCs.
    max_rows = max(_SUBLANE,
                   _TARGET_IN_BLOCK_BYTES // (min(ncols, 4096) * itemsize))
    if rows <= _SUBLANE:
        b_tile = rows  # full (small) row extent is a legal block dim
    else:
        b_tile = min(rows, max_rows, 4096)
        b_tile = max(_SUBLANE, _round_down(b_tile, _SUBLANE))
        if b_tile >= rows and rows >= 2 * _SUBLANE:
            b_tile = max(_SUBLANE, _round_down(rows // 2, _SUBLANE))
        if itemsize == 2 and b_tile >= 16:
            b_tile = _round_down(b_tile, 16)  # bf16 sublane packing
    grid_rows = pl.cdiv(rows, b_tile)

    # --- N tiling (reduction axis, last in grid): ~2 MiB per input block.
    target_cols = max(_LANE, _TARGET_IN_BLOCK_BYTES // (b_tile * itemsize))
    target_cols = min(target_cols, 65536)
    if ncols <= target_cols:
        tile_n = ncols  # full-extent block (legal even if not 128-aligned)
    else:
        tile_n = max(_LANE, _round_down(target_cols, _LANE))
    grid_n = pl.cdiv(ncols, tile_n)
    needs_mask = (ncols % tile_n) != 0

    # --- explicit VMEM budget: 2 inputs x 2 buffers + weights x 2 + out/acc.
    in_block = b_tile * tile_n * itemsize
    w_block = G * tile_n * 4
    vmem_est = 4 * in_block + 2 * w_block + 3 * 4 * b_tile + (1 << 16)
    vmem_limit = int(min(max(2 * vmem_est, 16 * 1024 * 1024), 32 * 1024 * 1024))

    kernel = functools.partial(_lat_rmse_kernel, g=G, ncols=ncols,
                               tile_n=tile_n, needs_mask=needs_mask)

    per_row = pl.pallas_call(
        kernel,
        out_shape=jax.ShapeDtypeStruct((rows, 1), jnp.float32),
        grid=(grid_rows, grid_n),
        in_specs=[
            pl.BlockSpec((b_tile, tile_n), lambda i, n: (i, n)),  # predictions
            pl.BlockSpec((b_tile, tile_n), lambda i, n: (i, n)),  # targets
            pl.BlockSpec((G, tile_n), lambda i, n: (0, n)),       # weights
        ],
        out_specs=pl.BlockSpec((b_tile, 1), lambda i, n: (i, 0)),
        scratch_shapes=[pltpu.VMEM((b_tile, 1), jnp.float32)],
        compiler_params=pltpu.CompilerParams(
            dimension_semantics=("parallel", "arbitrary"),
            vmem_limit_bytes=vmem_limit,
        ),
        cost_estimate=pl.CostEstimate(
            flops=4 * B * N,
            transcendentals=0,
            bytes_accessed=2 * B * N * itemsize + grid_rows * N * 4 + rows * 4,
        ),
    )(pred2, tgt2, w2)

    # Tiny glue: fold the G sub-rows back into per-batch sums, sqrt, mean.
    per_batch = jnp.sum(per_row.reshape(B, G), axis=1)
    return jnp.mean(jnp.sqrt(per_batch))


latitude_weighted_rmse = jax.jit(_latitude_weighted_rmse_impl)


def _reference(predictions, targets, latitude_grid):
    w = jnp.cos(jnp.asarray(latitude_grid, dtype=jnp.float32) * (np.pi / 180.0))
    w = w / jnp.mean(w)
    se = (predictions.astype(jnp.float32) - targets.astype(jnp.float32)) ** 2
    wse = se * w[None]
    per_b = jnp.mean(wse, axis=tuple(range(1, wse.ndim)))
    return jnp.mean(jnp.sqrt(per_b))


if __name__ == "__main__":
    B, H, W = 2, 16, 64  # 16 unique latitudes x 64 longitude points (as in the module)

    sorted_latitudes = np.linspace(-80.0, 80.0, H, dtype=np.float32)
    latitude_grid = np.tile(sorted_latitudes.reshape(-1, 1), (1, W))

    key = jax.random.PRNGKey(0)
    k1, k2 = jax.random.split(key)
    predictions = jax.random.normal(k1, (B, H, W), dtype=jnp.float32)
    targets = jax.random.normal(k2, (B, H, W), dtype=jnp.float32)

    loss = latitude_weighted_rmse(predictions, targets, latitude_grid)
    loss = jax.block_until_ready(loss)
    ref = _reference(predictions, targets, latitude_grid)
    assert np.allclose(np.asarray(loss), np.asarray(ref), rtol=1e-5, atol=1e-5), (loss, ref)

    # bf16 inputs: no host-side convert pass, upcast happens inside the kernel.
    pred_bf16 = predictions.astype(jnp.bfloat16)
    tgt_bf16 = targets.astype(jnp.bfloat16)
    loss_bf16 = jax.block_until_ready(
        latitude_weighted_rmse(pred_bf16, tgt_bf16, latitude_grid))
    ref_bf16 = _reference(pred_bf16.astype(jnp.float32),
                          tgt_bf16.astype(jnp.float32), latitude_grid)
    assert np.allclose(np.asarray(loss_bf16), np.asarray(ref_bf16),
                       rtol=1e-4, atol=1e-4), (loss_bf16, ref_bf16)

    print("KERNEL_OK")
</pallas_src>

<mosaic_0001>
module attributes {stable_mosaic.version = 11 : i64} {
  func.func @_lat_rmse_kernel(%arg0: i32, %arg1: i32, %arg2: memref<8x128xf32, #tpu.memory_space<vmem>>, %arg3: memref<8x128xf32, #tpu.memory_space<vmem>>, %arg4: memref<8x128xf32, #tpu.memory_space<vmem>>, %arg5: memref<8x1xf32, #tpu.memory_space<vmem>>, %arg6: memref<8x1xf32, #tpu.memory_space<vmem>>) attributes {dimension_semantics = [#tpu.dimension_semantics<parallel>, #tpu.dimension_semantics<arbitrary>], iteration_bounds = array<i64: 2, 1>, scalar_prefetch = 0 : i64, scratch_operands = 1 : i64, tpu.core_type = #tpu.core_type<tc>, window_params = [{transform_indices = @transform_0, window_bounds = array<i64: 8, 128>}, {transform_indices = @transform_1, window_bounds = array<i64: 8, 128>}, {transform_indices = @transform_2, window_bounds = array<i64: 8, 128>}, {transform_indices = @transform_3, window_bounds = array<i64: 8, 1>}]} {
    %c0_i32 = arith.constant 0 : i32
    %0 = arith.cmpi eq, %arg1, %c0_i32 : i32
    %1 = arith.extui %0 : i1 to i32
    %c0_i32_0 = arith.constant 0 : i32
    %2 = arith.cmpi ne, %1, %c0_i32_0 : i32
    scf.if %2 {
      %cst_12 = arith.constant 0.000000e+00 : f32
      %17 = vector.broadcast %cst_12 : f32 to vector<8x1xf32>
      %c0_13 = arith.constant 0 : index
      %c0_14 = arith.constant 0 : index
      %18 = vector.load %arg6[%c0_13, %c0_14] : memref<8x1xf32, #tpu.memory_space<vmem>>, vector<8x1xf32>
      tpu.vector_store %arg6[%c0_13, %c0_14], %17 {strides = array<i32>} : memref<8x1xf32, #tpu.memory_space<vmem>>, vector<8x1xf32>,
    } else {
    }
    %c0 = arith.constant 0 : index
    %c0_1 = arith.constant 0 : index
    %3 = vector.load %arg2[%c0, %c0_1] : memref<8x128xf32, #tpu.memory_space<vmem>>, vector<8x128xf32>
    %c0_2 = arith.constant 0 : index
    %c0_3 = arith.constant 0 : index
    %4 = vector.load %arg3[%c0_2, %c0_3] : memref<8x128xf32, #tpu.memory_space<vmem>>, vector<8x128xf32>
    %5 = arith.subf %3, %4 : vector<8x128xf32>
    %6 = arith.mulf %5, %5 : vector<8x128xf32>
    %c0_4 = arith.constant 0 : index
    %c0_5 = arith.constant 0 : index
    %7 = vector.load %arg4[%c0_4, %c0_5] : memref<8x128xf32, #tpu.memory_space<vmem>>, vector<8x128xf32>
    %8 = arith.mulf %6, %7 : vector<8x128xf32>
    %c0_6 = arith.constant 0 : index
    %c0_7 = arith.constant 0 : index
    %9 = vector.load %arg6[%c0_6, %c0_7] : memref<8x1xf32, #tpu.memory_space<vmem>>, vector<8x1xf32>
    %cst = arith.constant dense<0.000000e+00> : vector<8xf32>
    %10 = vector.multi_reduction <add>, %8, %cst [1] : vector<8x128xf32> to vector<8xf32>
    %11 = vector.shape_cast %10 : vector<8xf32> to vector<8x1xf32>
    %12 = arith.addf %9, %11 : vector<8x1xf32>
    %c0_8 = arith.constant 0 : index
    %c0_9 = arith.constant 0 : index
    %13 = vector.load %arg6[%c0_8, %c0_9] : memref<8x1xf32, #tpu.memory_space<vmem>>, vector<8x1xf32>
    tpu.vector_store %arg6[%c0_8, %c0_9], %12 {strides = array<i32>} : memref<8x1xf32, #tpu.memory_space<vmem>>, vector<8x1xf32>,
    %c0_i32_10 = arith.constant 0 : i32
    %14 = arith.cmpi eq, %arg1, %c0_i32_10 : i32
    %15 = arith.extui %14 : i1 to i32
    %c0_i32_11 = arith.constant 0 : i32
    %16 = arith.cmpi ne, %15, %c0_i32_11 : i32
    scf.if %16 {
      %c0_12 = arith.constant 0 : index
      %c0_13 = arith.constant 0 : index
      %17 = vector.load %arg6[%c0_12, %c0_13] : memref<8x1xf32, #tpu.memory_space<vmem>>, vector<8x1xf32>
      %c0_14 = arith.constant 0 : index
      %c0_15 = arith.constant 0 : index
      %18 = vector.load %arg5[%c0_14, %c0_15] : memref<8x1xf32, #tpu.memory_space<vmem>>, vector<8x1xf32>
      tpu.vector_store %arg5[%c0_14, %c0_15], %17 {strides = array<i32>} : memref<8x1xf32, #tpu.memory_space<vmem>>, vector<8x1xf32>,
    } else {
    }
    return
  }
  func.func @transform_0(%arg0: i32, %arg1: i32) -> (i32, i32) {
    %c0_i32 = arith.constant 0 : i32
    return %arg0, %arg1 : i32, i32
  }
  func.func @transform_1(%arg0: i32, %arg1: i32) -> (i32, i32) {
    %c0_i32 = arith.constant 0 : i32
    return %arg0, %arg1 : i32, i32
  }
  func.func @transform_2(%arg0: i32, %arg1: i32) -> (i32, i32) {
    %c0_i32 = arith.constant 0 : i32
    %c0_i32_0 = arith.constant 0 : i32
    return %c0_i32, %arg1 : i32, i32
  }
  func.func @transform_3(%arg0: i32, %arg1: i32) -> (i32, i32) {
    %c0_i32 = arith.constant 0 : i32
    %c0_i32_0 = arith.constant 0 : i32
    return %arg0, %c0_i32 : i32, i32
  }
}

</mosaic_0001>

<llo_original>
// kernel: _latitude_weighted_rmse_impl.1
$region0: #{_latitude_weighted_rmse_impl.1}
  #allocation0 [shape = 'u32[]', space=smem, size = 0x4, offset = 0x4, fixed_abs, tag = 'smem constant byte address 0x4 - core index']
  #allocation1 [shape = 'u32[144,128]{1,0:T(1,128)}', space=vmem, size = 0x12000, scoped, tag = 'internal scratch']
  #allocation2 [shape = 'f32[8,1]{1,0:T(8,128)}', space=vmem, size = 0x1000, scoped, tag = 'scratch operand']
  %s0 = inlined_call_operand.vmem [shape: f32[16,128], index: 0, kind: input, shape index: {}]
  %s1 = inlined_call_operand.vmem [shape: f32[16,128], index: 1, kind: input, shape index: {}]
  %s2 = inlined_call_operand.vmem [shape: f32[8,128], index: 2, kind: input, shape index: {}]
  %s3 = inlined_call_operand.vmem [shape: f32[16,1], index: 3, kind: output, shape index: {}]
  %s4 = sld [smem:[#allocation0]]
  $region53: #{_latitude_weighted_rmse_impl.1} parent=0
    _
  %s6 = ssub.s32 1, %s4
  %s7 = scalar_select 0, %s6, %s4
  loop: start=0, step=1, limit=4
  $region2: #{_latitude_weighted_rmse_impl.1} parent=0 // loop_pre_header
    _
  $region3: #{_latitude_weighted_rmse_impl.1} parent=0 // loop_header
    %s9 = sphi 0, %s13
    %p10 = scmp.ge.s32.totalorder %s9, 4
    %s16 = sphi 0, %s28
    %s17 = sphi 0, %s24
    %s18 = sphi 0, %s16
    %s19 = sphi 0, %s17
    %s20 = sphi 0, %s18
    %s21 = sphi 0, %s19
    %s33 = sphi 0, %s35
    %s36 = sphi 0, %s33
    %s37 = sphi 0, %s36
    %s53 = sphi 0, %s37
    %s61 = sphi 0, %s63
    %s64 = sphi 0, %s61
    %s65 = sphi 0, %s64
    %s81 = sphi 0, %s65
    %s87 = sphi 0, %s89
    %s90 = sphi 0, %s87
    %s91 = sphi 0, %s90
    %s107 = sphi 0, %s91
    %s113 = sphi 0, %s115
    %s116 = sphi 0, %s113
    %s117 = sphi 0, %s116
    %s133 = sphi 0, %s117
  $region4: #{_latitude_weighted_rmse_impl.1} parent=0 // loop_header_branch
    %12 = sbr.rel (%p10) target = $region8
  $region5: #{_latitude_weighted_rmse_impl.1} parent=0 // loop_body
    %s14 = ssub.s32 %s9, 1
    %s15 = ssub.s32 %s9, 2
    %s22 = sadd.s32 1, %s17
    %p23 = scmp.ge.s32.totalorder %s22, 1
    %s24 = scalar_select %p23, 0, %s22
    %s25 = sadd.s32 1, %s16
    %s26 = scalar_select %p23, %s25, %s16
    %p27 = scmp.ge.s32.totalorder %s26, 2
    %s28 = scalar_select %p27, 0, %s26
    %s29 = ssub.s32 %s16, %s28
    %s30 = ssub.s32 %s17, %s24
    %s31 = sor.u32 %s29, %s30
    %p32 = scmp.eq.s32.totalorder %s31, 0
    %s34 = sadd.s32 %s33, 1
    %s35 = scalar_select %p32, %s33, %s34
    %p38 = pneg %p32
    %p39 = scmp.eq.s32.totalorder %s9, 1
    %p40 = por %p38, %p39
    %p41 = scmp.ne.s32.totalorder %s33, %s36
    %p42 = scmp.eq.s32.totalorder %s9, 0
    %p43 = por %p41, %p42
    %p44 = scmp.ne.s32.totalorder %s33, %s36
    %p45 = scmp.eq.s32.totalorder %s14, 1
    %p46 = por %p44, %p45
    %p47 = scmp.ne.s32.totalorder %s36, %s37
    %p48 = scmp.eq.s32.totalorder %s14, 0
    %p49 = por %p47, %p48
    %p50 = scmp.ne.s32.totalorder %s36, %s37
    %p51 = scmp.eq.s32.totalorder %s15, 1
    %p52 = por %p50, %p51
    %p54 = scmp.ne.s32.totalorder %s37, %s53
    %p55 = scmp.eq.s32.totalorder %s15, 0
    %p56 = por %p54, %p55
    %s57 = ssub.s32 %s16, %s28
    %s58 = ssub.s32 %s17, %s24
    %s59 = sor.u32 %s57, %s58
    %p60 = scmp.eq.s32.totalorder %s59, 0
    %s62 = sadd.s32 %s61, 1
    %s63 = scalar_select %p60, %s61, %s62
    %p66 = pneg %p60
    %p67 = scmp.eq.s32.totalorder %s9, 1
    %p68 = por %p66, %p67
    %p69 = scmp.ne.s32.totalorder %s61, %s64
    %p70 = scmp.eq.s32.totalorder %s9, 0
    %p71 = por %p69, %p70
    %p72 = scmp.ne.s32.totalorder %s61, %s64
    %p73 = scmp.eq.s32.totalorder %s14, 1
    %p74 = por %p72, %p73
    %p75 = scmp.ne.s32.totalorder %s64, %s65
    %p76 = scmp.eq.s32.totalorder %s14, 0
    %p77 = por %p75, %p76
    %p78 = scmp.ne.s32.totalorder %s64, %s65
    %p79 = scmp.eq.s32.totalorder %s15, 1
    %p80 = por %p78, %p79
    %p82 = scmp.ne.s32.totalorder %s65, %s81
    %p83 = scmp.eq.s32.totalorder %s15, 0
    %p84 = por %p82, %p83
    %s85 = ssub.s32 %s17, %s24
    %p86 = scmp.eq.s32.totalorder %s85, 0
    %s88 = sadd.s32 %s87, 1
    %s89 = scalar_select %p86, %s87, %s88
    %p92 = pneg %p86
    %p93 = scmp.eq.s32.totalorder %s9, 1
    %p94 = por %p92, %p93
    %p95 = scmp.ne.s32.totalorder %s87, %s90
    %p96 = scmp.eq.s32.totalorder %s9, 0
    %p97 = por %p95, %p96
    %p98 = scmp.ne.s32.totalorder %s87, %s90
    %p99 = scmp.eq.s32.totalorder %s14, 1
    %p100 = por %p98, %p99
    %p101 = scmp.ne.s32.totalorder %s90, %s91
    %p102 = scmp.eq.s32.totalorder %s14, 0
    %p103 = por %p101, %p102
    %p104 = scmp.ne.s32.totalorder %s90, %s91
    %p105 = scmp.eq.s32.totalorder %s15, 1
    %p106 = por %p104, %p105
    %p108 = scmp.ne.s32.totalorder %s91, %s107
    %p109 = scmp.eq.s32.totalorder %s15, 0
    %p110 = por %p108, %p109
    %s111 = ssub.s32 %s16, %s28
    %p112 = scmp.eq.s32.totalorder %s111, 0
    %s114 = sadd.s32 %s113, 1
    %s115 = scalar_select %p112, %s113, %s114
    %p118 = pneg %p112
    %p119 = scmp.eq.s32.totalorder %s9, 1
    %p120 = por %p118, %p119
    %p121 = scmp.ne.s32.totalorder %s113, %s116
    %p122 = scmp.eq.s32.totalorder %s9, 0
    %p123 = por %p121, %p122
    %p124 = scmp.ne.s32.totalorder %s113, %s116
    %p125 = scmp.eq.s32.totalorder %s14, 1
    %p126 = por %p124, %p125
    %p127 = scmp.ne.s32.totalorder %s116, %s117
    %p128 = scmp.eq.s32.totalorder %s14, 0
    %p129 = por %p127, %p128
    %p130 = scmp.ne.s32.totalorder %s116, %s117
    %p131 = scmp.eq.s32.totalorder %s15, 1
    %p132 = por %p130, %p131
    %p134 = scmp.ne.s32.totalorder %s117, %s133
    %p135 = scmp.eq.s32.totalorder %s15, 0
    %p136 = por %p134, %p135
    %p137 = scmp.le.s32.totalorder 1, %s9
    %p138 = scmp.lt.s32.totalorder %s9, 3
    %p139 = pnand %p137, %p138
    %p140 = pneg %p139
    // Predicated region
    $region9: #{_latitude_weighted_rmse_impl.1} parent=5 // pred_check
      _
    $region10: #{_latitude_weighted_rmse_impl.1} parent=5 // pred_check_branch
      %142 = sbr.rel (%p139) target = $region12
    $region11: #{_latitude_weighted_rmse_impl.1} parent=5 // pred_region
      %s143 = ssub.s32 %s9, 1
      // Predicated region
      $region13: #{_latitude_weighted_rmse_impl.1} parent=11 // pred_check
        %p144 = pneg %p103
      $region14: #{_latitude_weighted_rmse_impl.1} parent=11 // pred_check_branch
        %146 = sbr.rel (%p144) target = $region16
      $region15: #{_latitude_weighted_rmse_impl.1} parent=11 // pred_region
        %p147 = scmp.lt.s32.totalorder %s19, 0
        %s148 = scalar_select %p147, %s19, 0
        %s149 = smul.addr %s148, 8
        %s150 = scalar_lea.vmem %s2, %s149
      $region16: #{_latitude_weighted_rmse_impl.1} parent=11 // pred_fallthru
        _
    $region12: #{_latitude_weighted_rmse_impl.1} parent=5 // pred_fallthru
      _
    %p151 = scmp.lt.s32.totalorder %s9, 2
    // Predicated region
    $region17: #{_latitude_weighted_rmse_impl.1} parent=5 // pred_check
      %p152 = pneg %p151
    $region18: #{_latitude_weighted_rmse_impl.1} parent=5 // pred_check_branch
      %154 = sbr.rel (%p152) target = $region20
    $region19: #{_latitude_weighted_rmse_impl.1} parent=5 // pred_region
      // Predicated region
      $region21: #{_latitude_weighted_rmse_impl.1} parent=19 // pred_check
        %p155 = pneg %p43
      $region22: #{_latitude_weighted_rmse_impl.1} parent=19 // pred_check_branch
        %157 = sbr.rel (%p155) target = $region24
      $region23: #{_latitude_weighted_rmse_impl.1} parent=19 // pred_region
        %p158 = scmp.lt.s32.totalorder %s16, 1
        %s159 = scalar_select %p158, %s16, 1
        %p160 = scmp.lt.s32.totalorder %s17, 0
        %s161 = scalar_select %p160, %s17, 0
        %s162 = sadd.s32 %s161, %s159
        %s163 = smul.addr %s162, 8
        %s164 = scalar_lea.vmem %s0, %s163
      $region24: #{_latitude_weighted_rmse_impl.1} parent=19 // pred_fallthru
        _
      // Predicated region
      $region25: #{_latitude_weighted_rmse_impl.1} parent=19 // pred_check
        %p165 = pneg %p71
      $region26: #{_latitude_weighted_rmse_impl.1} parent=19 // pred_check_branch
        %167 = sbr.rel (%p165) target = $region28
      $region27: #{_latitude_weighted_rmse_impl.1} parent=19 // pred_region
        %p168 = scmp.lt.s32.totalorder %s16, 1
        %s169 = scalar_select %p168, %s16, 1
        %p170 = scmp.lt.s32.totalorder %s17, 0
        %s171 = scalar_select %p170, %s17, 0
        %s172 = sadd.s32 %s171, %s169
        %s173 = smul.addr %s172, 8
        %s174 = scalar_lea.vmem %s1, %s173
      $region28: #{_latitude_weighted_rmse_impl.1} parent=19 // pred_fallthru
        _
    $region20: #{_latitude_weighted_rmse_impl.1} parent=5 // pred_fallthru
      _
    %p175 = scmp.le.s32.totalorder 1, %s9
    %p176 = scmp.lt.s32.totalorder %s9, 3
    %p177 = pnand %p175, %p176
    %p178 = pneg %p177
    // Predicated region
    $region29: #{_latitude_weighted_rmse_impl.1} parent=5 // pred_check
      _
    $region30: #{_latitude_weighted_rmse_impl.1} parent=5 // pred_check_branch
      %180 = sbr.rel (%p177) target = $region32
    $region31: #{_latitude_weighted_rmse_impl.1} parent=5 // pred_region
      %s181 = ssub.s32 %s9, 1
      %p182 = scmp.lt.s32.totalorder %s18, 1
      %s183 = scalar_select %p182, %s18, 1
      %p184 = scmp.lt.s32.totalorder %s19, 0
      %s185 = scalar_select %p184, %s19, 0
      %s186 = sadd.s32 %s185, %s183
      %s187 = smul.addr %s186, 8
      %s188 = scalar_lea.vmem %s0, %s187
      %p189 = pneg %p49
      %p190 = pneg %p46
      %p191 = scmp.lt.s32.totalorder %s18, 1
      %s192 = scalar_select %p191, %s18, 1
      %p193 = scmp.lt.s32.totalorder %s19, 0
      %s194 = scalar_select %p193, %s19, 0
      %s195 = sadd.s32 %s194, %s192
      %s196 = smul.addr %s195, 8
      %s197 = scalar_lea.vmem %s1, %s196
      %p198 = pneg %p77
      %p199 = pneg %p74
      %p200 = scmp.lt.s32.totalorder %s19, 0
      %s201 = scalar_select %p200, %s19, 0
      %s202 = smul.addr %s201, 8
      %s203 = scalar_lea.vmem %s2, %s202
      %p204 = pneg %p103
      %p205 = pneg %p100
      %p206 = pneg %p129
      %p207 = pneg %p126
      %p208 = scmp.lt.s32.totalorder %s18, 1
      %s209 = scalar_select %p208, %s18, 1
      %s210 = smul.addr %s209, 8
      %s211 = scalar_lea.vmem %s3, %s210
      %p212 = scmp.lt.s32.totalorder %s18, 1
      %s213 = scalar_select %p212, %s18, 1
      %p214 = scmp.lt.s32.totalorder %s19, 0
      %s215 = scalar_select %p214, %s19, 0
      %s216 = sadd.s32 %s215, %s213
      %s217 = smul.addr %s216, 8
      %s218 = scalar_lea.vmem %s0, %s217
      %p219 = scmp.lt.s32.totalorder %s18, 1
      %s220 = scalar_select %p219, %s18, 1
      %p221 = scmp.lt.s32.totalorder %s19, 0
      %s222 = scalar_select %p221, %s19, 0
      %s223 = sadd.s32 %s222, %s220
      %s224 = smul.addr %s223, 8
      %s225 = scalar_lea.vmem %s1, %s224
      %p226 = scmp.lt.s32.totalorder %s19, 0
      %s227 = scalar_select %p226, %s19, 0
      %s228 = smul.addr %s227, 8
      %s229 = scalar_lea.vmem %s2, %s228
      %p230 = scmp.lt.s32.totalorder %s18, 1
      %s231 = scalar_select %p230, %s18, 1
      %s232 = smul.addr %s231, 8
      %s233 = scalar_lea.vmem %s3, %s232
      %p234 = scmp.eq.s32.totalorder %s19, 0
      // Predicated region
      $region33: #{_latitude_weighted_rmse_impl.1} parent=31 // pred_check
        %p235 = pneg %p234
      $region34: #{_latitude_weighted_rmse_impl.1} parent=31 // pred_check_branch
        %237 = sbr.rel (%p235) target = $region36
      $region35: #{_latitude_weighted_rmse_impl.1} parent=31 // pred_region
        %vm238 = vcmask 7168
        %239 = vst.msk [vmem:[#allocation2] sm:$0xff] %vm238, 0.0
      $region36: #{_latitude_weighted_rmse_impl.1} parent=31 // pred_fallthru
        _
      %v240 = vld [vmem:[%s218] sm:$0xff]
      %v241 = vld [vmem:[%s225] sm:$0xff]
      %v242 = vsub.f32 %v240, %v241
      %v243 = vmul.f32 %v242, %v242
      %v244 = vld [vmem:[%s229] sm:$0xff]
      %v245 = vmul.f32 %v243, %v244
      %v246 = vld [vmem:[#allocation2] sm:$0xff]
      %247 = vadd.xlane.f32.xlu0 %v245
      %v248 = vpop.xlane.xlu0 %247
      %v249 = vadd.f32 %v246, %v248
      %vm250 = vcmask 7168
      %251 = vst.msk [vmem:[#allocation2] sm:$0xff] %vm250, %v249
      // Predicated region
      $region37: #{_latitude_weighted_rmse_impl.1} parent=31 // pred_check
        %p252 = pneg %p234
      $region38: #{_latitude_weighted_rmse_impl.1} parent=31 // pred_check_branch
        %254 = sbr.rel (%p252) target = $region40
      $region39: #{_latitude_weighted_rmse_impl.1} parent=31 // pred_region
        %v255 = vld [vmem:[#allocation2] sm:$0xff]
        %256 = vst.msk [vmem:[%s233] sm:$0xff] %vm250, %v255
      $region40: #{_latitude_weighted_rmse_impl.1} parent=31 // pred_fallthru
        _
      %p257 = scmp.lt.s32.totalorder %s18, 1
      %s258 = scalar_select %p257, %s18, 1
      %s259 = smul.addr %s258, 8
      %s260 = scalar_lea.vmem %s3, %s259
      // Predicated region
      $region41: #{_latitude_weighted_rmse_impl.1} parent=31 // pred_check
        %p261 = pneg %p126
      $region42: #{_latitude_weighted_rmse_impl.1} parent=31 // pred_check_branch
        %263 = sbr.rel (%p261) target = $region44
      $region43: #{_latitude_weighted_rmse_impl.1} parent=31 // pred_region
        _
      $region44: #{_latitude_weighted_rmse_impl.1} parent=31 // pred_fallthru
        _
    $region32: #{_latitude_weighted_rmse_impl.1} parent=5 // pred_fallthru
      _
    %p264 = scmp.le.s32.totalorder 2, %s9
    // Predicated region
    $region45: #{_latitude_weighted_rmse_impl.1} parent=5 // pred_check
      %p265 = pneg %p264
    $region46: #{_latitude_weighted_rmse_impl.1} parent=5 // pred_check_branch
      %267 = sbr.rel (%p265) target = $region48
    $region47: #{_latitude_weighted_rmse_impl.1} parent=5 // pred_region
      %s268 = ssub.s32 %s9, 2
      // Predicated region
      $region49: #{_latitude_weighted_rmse_impl.1} parent=47 // pred_check
        %p269 = pneg %p132
      $region50: #{_latitude_weighted_rmse_impl.1} parent=47 // pred_check_branch
        %271 = sbr.rel (%p269) target = $region52
      $region51: #{_latitude_weighted_rmse_impl.1} parent=47 // pred_region
        %p272 = scmp.lt.s32.totalorder %s20, 1
        %s273 = scalar_select %p272, %s20, 1
        %s274 = smul.addr %s273, 8
        %s275 = scalar_lea.vmem %s3, %s274
      $region52: #{_latitude_weighted_rmse_impl.1} parent=47 // pred_fallthru
        _
    $region48: #{_latitude_weighted_rmse_impl.1} parent=5 // pred_fallthru
      _
  $region6: #{_latitude_weighted_rmse_impl.1} parent=0 // loop_footer
    %s13 = sadd.s32 1, %s9
  $region7: #{_latitude_weighted_rmse_impl.1} parent=0 // loop_footer_branch
    %8 = sbr.rel target = $region3
  $region8: #{_latitude_weighted_rmse_impl.1} parent=0 // loop_exit
    _

</llo_original>
